<compile_context>
chip_gen: v7x
topology: tpu7x:2x2x1
jax: 0.10.0
libtpu: 0.0.40
codegen_flags: <defaults>
</compile_context>

<pallas_src>
import jax
import jax.numpy as jnp
from jax.experimental import pallas as pl
from jax.experimental.pallas import tpu as pltpu


_VMEM_TILE_BUDGET = 12 * 1024 * 1024   # conservative tile budget; fits every gen
_VMEM_LIMIT_BYTES = 32 * 1024 * 1024   # explicit scoped-VMEM limit


def _proj_kernel(x_ref, w_ref, b_ref, o_ref):
    # x_ref: (C, Nt)   lane-dense input tile
    # w_ref: (D, C)    resident bf16 weight (block index never changes)
    # b_ref: (D, 1)    resident f32 bias column (matches accumulator sublanes)
    # o_ref: (D, Nt)   lane-dense output tile
    x = x_ref[...].astype(jnp.bfloat16)                                # cast on the fly
    acc = jnp.dot(w_ref[...], x, preferred_element_type=jnp.float32)   # MXU, f32 acc
    o_ref[...] = (acc + b_ref[...]).astype(o_ref.dtype)                # f32 VPU bias add


def _lane_tile(extent, c, d, max_lanes):
    """Lane (last-dim) tile: multiple of 128, VMEM-budgeted, cdiv-grid friendly."""
    if extent <= 128:
        return extent                        # full-extent dims are always legal
    per_lane = 2 * 4 * (c + d)               # double-buffered f32 in+out blocks
    cap = max(128, (_VMEM_TILE_BUDGET // per_lane) // 128 * 128)
    t = min(max_lanes, cap, pl.cdiv(extent, 128) * 128)
    return max(128, (t // 128) * 128)


def submodel_forward(x, weight, bias, *, max_tile_lanes=4096):
    """x: (B, C_in, T); weight: (D, C_in); bias: (D,). Returns (B, D, T)."""
    B, C, T = x.shape
    D = weight.shape[0]

    w_bf = weight.astype(jnp.bfloat16)                 # one-time resident-weight cast
    bias_col = bias.astype(jnp.float32).reshape(D, 1)

    if T >= 128:
        # Transpose-free path: BlockSpec does the (B,C,T)->(B,D,T) layout directly.
        tt = _lane_tile(T, C, D, max_tile_lanes)
        grid = (B, pl.cdiv(T, tt))
        return pl.pallas_call(
            _proj_kernel,
            out_shape=jax.ShapeDtypeStruct((B, D, T), x.dtype),
            grid=grid,
            in_specs=[
                pl.BlockSpec((pl.Squeezed(), C, tt), lambda b, t: (b, 0, t)),
                pl.BlockSpec((D, C), lambda b, t: (0, 0)),   # weight, resident
                pl.BlockSpec((D, 1), lambda b, t: (0, 0)),   # bias, resident
            ],
            out_specs=pl.BlockSpec((pl.Squeezed(), D, tt), lambda b, t: (b, 0, t)),
            compiler_params=pltpu.CompilerParams(
                dimension_semantics=("parallel", "parallel"),
                vmem_limit_bytes=_VMEM_LIMIT_BYTES,
            ),
        )(x, w_bf, bias_col)

    # Short-sequence path: flatten to (C, B*T) so the MXU RHS and the output
    # stay lane-dense (T alone is too narrow for full vector-store lanes).
    N = B * T
    x2 = jnp.transpose(x, (1, 0, 2)).reshape(C, N)
    tn = _lane_tile(N, C, D, max_tile_lanes)
    grid = (pl.cdiv(N, tn),)
    out2 = pl.pallas_call(
        _proj_kernel,
        out_shape=jax.ShapeDtypeStruct((D, N), x.dtype),
        grid=grid,
        in_specs=[
            pl.BlockSpec((C, tn), lambda n: (0, n)),     # x tile (lane-dense)
            pl.BlockSpec((D, C), lambda n: (0, 0)),      # weight, resident
            pl.BlockSpec((D, 1), lambda n: (0, 0)),      # bias, resident
        ],
        out_specs=pl.BlockSpec((D, tn), lambda n: (0, n)),
        compiler_params=pltpu.CompilerParams(
            dimension_semantics=("parallel",),
            vmem_limit_bytes=_VMEM_LIMIT_BYTES,
        ),
    )(x2, w_bf, bias_col)
    # (D, B*T) -> (B, D, T) to preserve the module's channels-first output.
    return jnp.transpose(out2.reshape(D, B, T), (1, 0, 2))


if __name__ == "__main__":
    key = jax.random.PRNGKey(0)

    def _check(B, C_IN, T, D, k):
        kx, kw, kb = jax.random.split(k, 3)
        x = jax.random.normal(kx, (B, C_IN, T), dtype=jnp.float32)
        weight = jax.random.normal(kw, (D, C_IN), dtype=jnp.float32) * 0.05
        bias = jax.random.normal(kb, (D,), dtype=jnp.float32) * 0.05

        out = jax.block_until_ready(submodel_forward(x, weight, bias))
        assert out.shape == (B, D, T)

        # Reference mirroring the kernel's bf16 MXU operands + f32 accumulation.
        w_bf = weight.astype(jnp.bfloat16).astype(jnp.float32)
        x_bf = x.astype(jnp.bfloat16).astype(jnp.float32)
        ref_bf = jnp.einsum("dc,bct->bdt", w_bf, x_bf) + bias[None, :, None]
        assert jnp.allclose(out, ref_bf, atol=1e-4, rtol=1e-4)

        # Looser check against the full-f32 PyTorch Linear semantics.
        ref_f32 = jnp.einsum("dc,bct->bdt", weight, x) + bias[None, :, None]
        assert jnp.allclose(out, ref_f32, atol=5e-2, rtol=5e-2)

    k1, k2 = jax.random.split(key)
    # Small shapes consistent with the module: batch=2, input_dim=32, seq=8,
    # encoder_embed_dim=32 (short-T flattened path).
    _check(2, 32, 8, 32, k1)
    # Also exercise the transpose-free long-sequence path.
    _check(2, 32, 128, 32, k2)

    print("KERNEL_OK")
</pallas_src>

<mosaic_0001>
module attributes {stable_mosaic.version = 11 : i64} {
  func.func @_proj_kernel(%arg0: i32, %arg1: memref<32x16xf32, #tpu.memory_space<vmem>>, %arg2: memref<32x32xbf16, #tpu.memory_space<vmem>>, %arg3: memref<32x1xf32, #tpu.memory_space<vmem>>, %arg4: memref<32x16xf32, #tpu.memory_space<vmem>>) attributes {dimension_semantics = [#tpu.dimension_semantics<parallel>], iteration_bounds = array<i64: 1>, scalar_prefetch = 0 : i64, scratch_operands = 0 : i64, tpu.core_type = #tpu.core_type<tc>, window_params = [{transform_indices = @transform_0, window_bounds = array<i64: 32, 16>}, {pipeline_mode = #tpu.pipeline_mode<synchronous>, transform_indices = @transform_1, window_bounds = array<i64: 32, 32>}, {pipeline_mode = #tpu.pipeline_mode<synchronous>, transform_indices = @transform_2, window_bounds = array<i64: 32, 1>}, {transform_indices = @transform_3, window_bounds = array<i64: 32, 16>}]} {
    %c0 = arith.constant 0 : index
    %c0_0 = arith.constant 0 : index
    %0 = vector.load %arg1[%c0, %c0_0] : memref<32x16xf32, #tpu.memory_space<vmem>>, vector<32x16xf32>
    %1 = arith.truncf %0 : vector<32x16xf32> to vector<32x16xbf16>
    %c0_1 = arith.constant 0 : index
    %c0_2 = arith.constant 0 : index
    %2 = vector.load %arg2[%c0_1, %c0_2] : memref<32x32xbf16, #tpu.memory_space<vmem>>, vector<32x32xbf16>
    %cst = arith.constant dense<0.000000e+00> : vector<32x16xf32>
    %3 = tpu.matmul %2, %1, %cst {dimension_numbers = #tpu.dot_dimension_numbers<[1], [0], [0], [1], [0, 0, 1, 1], [], []>} : vector<32x32xbf16>, vector<32x16xbf16>, vector<32x16xf32> -> vector<32x16xf32>
    %c0_3 = arith.constant 0 : index
    %c0_4 = arith.constant 0 : index
    %4 = vector.load %arg3[%c0_3, %c0_4] : memref<32x1xf32, #tpu.memory_space<vmem>>, vector<32x1xf32>
    %5 = vector.broadcast %4 : vector<32x1xf32> to vector<32x16xf32>
    %6 = arith.addf %3, %5 : vector<32x16xf32>
    %c0_5 = arith.constant 0 : index
    %c0_6 = arith.constant 0 : index
    %7 = vector.load %arg4[%c0_5, %c0_6] : memref<32x16xf32, #tpu.memory_space<vmem>>, vector<32x16xf32>
    tpu.vector_store %arg4[%c0_5, %c0_6], %6 {strides = array<i32>} : memref<32x16xf32, #tpu.memory_space<vmem>>, vector<32x16xf32>,
    return
  }
  func.func @transform_0(%arg0: i32) -> (i32, i32) {
    %c0_i32 = arith.constant 0 : i32
    %c0_i32_0 = arith.constant 0 : i32
    return %c0_i32, %arg0 : i32, i32
  }
  func.func @transform_1(%arg0: i32) -> (i32, i32) {
    %c0_i32 = arith.constant 0 : i32
    %c0_i32_0 = arith.constant 0 : i32
    %c0_i32_1 = arith.constant 0 : i32
    return %c0_i32, %c0_i32_0 : i32, i32
  }
  func.func @transform_2(%arg0: i32) -> (i32, i32) {
    %c0_i32 = arith.constant 0 : i32
    %c0_i32_0 = arith.constant 0 : i32
    %c0_i32_1 = arith.constant 0 : i32
    return %c0_i32, %c0_i32_0 : i32, i32
  }
  func.func @transform_3(%arg0: i32) -> (i32, i32) {
    %c0_i32 = arith.constant 0 : i32
    %c0_i32_0 = arith.constant 0 : i32
    return %c0_i32, %arg0 : i32, i32
  }
}

</mosaic_0001>

<llo_original>
// kernel: tpu_custom_call.1
$region0: #{tpu_custom_call.1}
  #allocation0 [shape = 'u32[]', space=smem, size = 0x4, offset = 0x4, fixed_abs, tag = 'smem constant byte address 0x4 - core index']
  #allocation1 [shape = 'u32[144,128]{1,0:T(1,128)}', space=vmem, size = 0x12000, scoped, tag = 'internal scratch']
  %s0 = inlined_call_operand.vmem [shape: f32[32,16], index: 0, kind: input, shape index: {}]
  %s1 = inlined_call_operand.vmem [shape: bf16[32,32], index: 1, kind: input, shape index: {}]
  %s2 = inlined_call_operand.vmem [shape: f32[32,1], index: 2, kind: input, shape index: {}]
  %s3 = inlined_call_operand.vmem [shape: f32[32,16], index: 3, kind: output, shape index: {}]
  %s4 = sld [smem:[#allocation0]]
  $region22: #{tpu_custom_call.1} parent=0
    _
  %s6 = ssub.s32 1, %s4
  %s7 = scalar_select 0, %s6, %s4
  // Predicated region
  $region2: #{tpu_custom_call.1} parent=0 // pred_check
    _
  $region3: #{tpu_custom_call.1} parent=0 // pred_check_branch
    %9 = sbr.rel (0) target = $region5
  $region4: #{tpu_custom_call.1} parent=0 // pred_region
    _
  $region5: #{tpu_custom_call.1} parent=0 // pred_fallthru
    _
  // Predicated region
  $region6: #{tpu_custom_call.1} parent=0 // pred_check
    _
  $region7: #{tpu_custom_call.1} parent=0 // pred_check_branch
    %11 = sbr.rel (0) target = $region9
  $region8: #{tpu_custom_call.1} parent=0 // pred_region
    _
  $region9: #{tpu_custom_call.1} parent=0 // pred_fallthru
    _
  // Predicated region
  $region10: #{tpu_custom_call.1} parent=0 // pred_check
    _
  $region11: #{tpu_custom_call.1} parent=0 // pred_check_branch
    %13 = sbr.rel (0) target = $region13
  $region12: #{tpu_custom_call.1} parent=0 // pred_region
    _
  $region13: #{tpu_custom_call.1} parent=0 // pred_fallthru
    _
  %v15 = vld [vmem:[%s0] sm:$0xff]
  %v16 = vld [vmem:[%s0 + $0x8] sm:$0xff]
  %v17 = vld [vmem:[%s0 + $0x10] sm:$0xff]
  %v18 = vld [vmem:[%s0 + $0x18] sm:$0xff]
  %v19 = vpack.c.bf16 %v16, %v15
  %v20 = vpack.c.bf16 %v18, %v17
  %v21 = vld [vmem:[%s1] sm:$0xf]
  %v22 = vld [vmem:[%s1 + $0x4] sm:$0xf]
  %v23 = vld [vmem:[%s1 + $0x8] sm:$0xf]
  %v24 = vld [vmem:[%s1 + $0xc] sm:$0xf]
  %v25 = vld [vmem:[%s2] sm:$0xff]
  %v26 = vld [vmem:[%s2 + $0x8] sm:$0xff]
  %v27 = vld [vmem:[%s2 + $0x10] sm:$0xff]
  %v28 = vld [vmem:[%s2 + $0x18] sm:$0xff]
  %30 = vset.pattern.permute.xlu0 0
  %31 = vperm.xlu0 %30, %v25
  %v32 = vpop.permute.xlu0 %31
  %35 = vset.pattern.permute.xlu0 0
  %36 = vperm.xlu0 %35, %v26
  %v37 = vpop.permute.xlu0 %36
  %40 = vset.pattern.permute.xlu0 0
  %41 = vperm.xlu0 %40, %v27
  %v42 = vpop.permute.xlu0 %41
  %45 = vset.pattern.permute.xlu0 0
  %46 = vperm.xlu0 %45, %v28
  %v47 = vpop.permute.xlu0 %46
  %v53 = vunpack.c.l.b16 %v21
  %v54 = vunpack.c.l.b16 %v22
  %v55 = vunpack.c.l.b16 %v23
  %v56 = vunpack.c.l.b16 %v24
  %v57 = vpack.c.b16 %v54, %v53
  %v58 = vpack.c.b16 %v56, %v55
  %vm59 = vcmask 261120
  %v61 = vsel %vm59, %v57, 0
  %v64 = vsel %vm59, %v58, 0
  %66 = vmatprep.subr.bf16.mxu0 0
  %67 = vmatpush1.bf16.msra.mxu0 %v19
  %68 = vmatprep.subr.bf16.mxu0 0
  %69 = vmatpush1.bf16.msra.mxu0 %v20
  %70 = vmatprep.subr.bf16.mxu0 0
  %71 = vmatpush1.bf16.msra.mxu0 0
  %72 = vmatprep.subr.bf16.mxu0 0
  %73 = vmatpush1.bf16.msra.mxu0 0
  %74 = vmatprep.subr.bf16.mxu0 0
  %75 = vmatpush1.bf16.msra.mxu0 0
  %76 = vmatprep.subr.bf16.mxu0 0
  %77 = vmatpush1.bf16.msra.mxu0 0
  %78 = vmatprep.subr.bf16.mxu0 0
  %79 = vmatpush1.bf16.msra.mxu0 0
  %80 = vmatprep.subr.bf16.mxu0 0
  %81 = vmatpush1.bf16.msra.mxu0 0
  %82 = vmatprep.subr.bf16.mxu0 0
  %83 = vmatpush1.bf16.msra.mxu0 0
  %84 = vmatprep.subr.bf16.mxu0 0
  %85 = vmatpush1.bf16.msra.mxu0 0
  %86 = vmatprep.subr.bf16.mxu0 0
  %87 = vmatpush1.bf16.msra.mxu0 0
  %88 = vmatprep.subr.bf16.mxu0 0
  %89 = vmatpush1.bf16.msra.mxu0 0
  %90 = vmatprep.subr.bf16.mxu0 0
  %91 = vmatpush1.bf16.msra.mxu0 0
  %92 = vmatprep.subr.bf16.mxu0 0
  %93 = vmatpush1.bf16.msra.mxu0 0
  %94 = vmatprep.subr.bf16.mxu0 0
  %95 = vmatpush1.bf16.msra.mxu0 0
  %96 = vmatprep.subr.bf16.mxu0 0
  %97 = vmatpush1.bf16.msra.mxu0 0
  %98 = vmatprep.mubr.bf16.mxu0 0
  %99 = vmatmul.mubr.bf16.gmra.mrb[0].mxu0 %v61
  %v100 = vpop.f32.mrb[0].mxu0
  %v101 = vadd.f32 %v32, %v100
  %v102 = vpop.f32.mrb[0].mxu0
  %v103 = vpop.f32.mrb[0].mxu0
  %v104 = vadd.f32 %v37, %v103
  %v105 = vpop.f32.mrb[0].mxu0
  %106 = vmatprep.mubr.bf16.mxu0 0
  %107 = vmatmul.mubr.bf16.gmra.mrb[0].mxu0 %v64
  %v108 = vpop.f32.mrb[0].mxu0
  %v109 = vadd.f32 %v42, %v108
  %v110 = vpop.f32.mrb[0].mxu0
  %v111 = vpop.f32.mrb[0].mxu0
  %v112 = vadd.f32 %v47, %v111
  %v113 = vpop.f32.mrb[0].mxu0
  %114 = vdwg.mxu0
  %vm115 = vcmask 130048
  %116 = vst.msk [vmem:[%s3] sm:$0xff] %vm115, %v101
  %117 = vst.msk [vmem:[%s3 + $0x8] sm:$0xff] %vm115, %v104
  %118 = vst.msk [vmem:[%s3 + $0x10] sm:$0xff] %vm115, %v109
  %119 = vst.msk [vmem:[%s3 + $0x18] sm:$0xff] %vm115, %v112
  // Predicated region
  $region14: #{tpu_custom_call.1} parent=0 // pred_check
    _
  $region15: #{tpu_custom_call.1} parent=0 // pred_check_branch
    %121 = sbr.rel (0) target = $region17
  $region16: #{tpu_custom_call.1} parent=0 // pred_region
    _
  $region17: #{tpu_custom_call.1} parent=0 // pred_fallthru
    _
  // Predicated region
  $region18: #{tpu_custom_call.1} parent=0 // pred_check
    _
  $region19: #{tpu_custom_call.1} parent=0 // pred_check_branch
    %123 = sbr.rel (0) target = $region21
  $region20: #{tpu_custom_call.1} parent=0 // pred_region
    _
  $region21: #{tpu_custom_call.1} parent=0 // pred_fallthru
    _

</llo_original>
